<compile_context>
chip_gen: v7x
topology: tpu7x:2x2x1
jax: 0.10.0
libtpu: 0.0.40
codegen_flags: <defaults>
</compile_context>

<pallas_src>
import functools

import jax
import jax.numpy as jnp
from jax.experimental import pallas as pl
from jax.experimental.pallas import tpu as pltpu

ROW_GRAN = 16  # bf16 packs 16 rows per vreg -> 16-row batch-tile granularity


def net_s_kernel(x_ref, wb_ref, w1_ref, b1_ref, wo_ref, bo_ref, o_ref):
    # x arrives f32 from HBM; cast to bf16 in-kernel (hidden under the DMA).
    x_bf = x_ref[...].astype(jnp.bfloat16)

    # c1 = relu(x @ Wb)                       (bf16 MXU pass, f32 accumulation)
    c1 = jnp.maximum(
        jnp.dot(x_bf, wb_ref[...], preferred_element_type=jnp.float32), 0.0
    )
    # c2 = relu(c1 @ W1 + b1)                 (bias add / relu kept in f32)
    c2 = jnp.maximum(
        jnp.dot(c1.astype(jnp.bfloat16), w1_ref[...],
                preferred_element_type=jnp.float32) + b1_ref[...],
        0.0,
    )
    # out = c2 @ Wo + bo                      (narrow q-wide bf16 store)
    o_ref[...] = (
        jnp.dot(c2.astype(jnp.bfloat16), wo_ref[...],
                preferred_element_type=jnp.float32) + bo_ref[...]
    ).astype(o_ref.dtype)


def prepare_params(wb, w1, b1, wo, bo):
    """One-time param prep (hoisted out of the per-call path)."""
    return (
        wb.astype(jnp.bfloat16),                      # (p, k)
        w1.astype(jnp.bfloat16),                      # (k, h)
        b1.astype(jnp.float32).reshape(1, -1),        # (1, h)
        wo.astype(jnp.bfloat16),                      # (h, q)
        bo.astype(jnp.float32).reshape(1, -1),        # (1, q)
    )


def _round_up(a, b):
    return ((a + b - 1) // b) * b


@functools.partial(jax.jit, static_argnames=("tile_n",))
def net_s_forward(x, wb_bf, w1_bf, b1_f, wo_bf, bo_f, tile_n=16384):
    """x: (N, p) f32; prepped params from prepare_params. Returns (N, q) f32."""
    N, p = x.shape
    k = wb_bf.shape[1]
    h = w1_bf.shape[1]
    q = wo_bf.shape[1]

    # Batch tile: multiple of 16 rows, capped so large N yields >= ~8 grid steps
    # (keeps both v7x TensorCores busy via the "parallel" batch axis).
    tn = _round_up(max(1, min(int(tile_n), N)), ROW_GRAN)
    tn_cap = _round_up(pl.cdiv(N, 8), ROW_GRAN)
    tn = max(ROW_GRAN, min(tn, tn_cap))

    n_blocks = pl.cdiv(N, tn)
    n_pad = n_blocks * tn
    if n_pad != N:
        x = jnp.pad(x, ((0, n_pad - N), (0, 0)))  # fused under jit

    const = lambda i: (0, 0)  # weights/biases stay VMEM-resident across steps
    # TODO(synk): could mark the five constant-index specs pipeline_mode=pl.Buffered(1)
    # (or fold biases into the weight slabs) to free a little VMEM headroom.

    out = pl.pallas_call(
        net_s_kernel,
        out_shape=jax.ShapeDtypeStruct((n_pad, q), jnp.bfloat16),
        grid=(n_blocks,),
        in_specs=[
            pl.BlockSpec((tn, p), lambda i: (i, 0)),  # streamed f32 x tiles
            pl.BlockSpec((p, k), const),
            pl.BlockSpec((k, h), const),
            pl.BlockSpec((1, h), const),
            pl.BlockSpec((h, q), const),
            pl.BlockSpec((1, q), const),
        ],
        out_specs=pl.BlockSpec((tn, q), lambda i: (i, 0)),
        compiler_params=pltpu.CompilerParams(
            dimension_semantics=("parallel",),       # megacore on v7x
            vmem_limit_bytes=48 * 1024 * 1024,       # fits v7x's 64 MiB VMEM
        ),
    )(x, wb_bf, w1_bf, b1_f, wo_bf, bo_f)

    return out[:N, :].astype(jnp.float32)


def init_params(key, p, k, h, q):
    """Deterministic parameter init (uniform, PyTorch-Linear-like fan_in scaling)."""
    ks = jax.random.split(key, 5)
    u = lambda kk, shape, fan_in: jax.random.uniform(
        kk, shape, jnp.float32,
        minval=-1.0 / jnp.sqrt(fan_in), maxval=1.0 / jnp.sqrt(fan_in))
    wb = u(ks[0], (p, k), p)   # self.b.weight.T   (bias=False)
    w1 = u(ks[1], (k, h), k)   # self.h1.weight.T
    b1 = u(ks[2], (1, h), k)   # self.h1.bias
    wo = u(ks[3], (h, q), h)   # self.out.weight.T
    bo = u(ks[4], (1, q), h)   # self.out.bias
    return wb, w1, b1, wo, bo


def _ref_forward_bf16_boundary(x, wb, w1, b1, wo, bo):
    """Pure-JAX reference replicating the kernel's bf16 roundings exactly."""
    f = lambda a: a.astype(jnp.bfloat16).astype(jnp.float32)
    c1 = jnp.maximum(f(x) @ f(wb), 0.0)
    c2 = jnp.maximum(f(c1) @ f(w1) + b1, 0.0)
    out = f(c2) @ f(wo) + bo
    return out.astype(jnp.bfloat16).astype(jnp.float32)  # kernel stores bf16


if __name__ == "__main__":
    # Small shapes consistent with the module: batch N, in=p, k, hidden=h, out=q.
    N, p, k, h, q = 8, 32, 16, 32, 8

    key = jax.random.PRNGKey(0)
    kx, kp = jax.random.split(key)
    x = jax.random.normal(kx, (N, p), dtype=jnp.float32)
    wb, w1, b1, wo, bo = init_params(kp, p, k, h, q)
    params = prepare_params(wb, w1, b1, wo, bo)

    out = net_s_forward(x, *params)
    out = jax.block_until_ready(out)
    assert out.shape == (N, q)

    # Matches the bf16-boundary reference tightly (f32 accumulation on MXU).
    ref_bf = _ref_forward_bf16_boundary(x, wb, w1, b1, wo, bo)
    assert jnp.allclose(out, ref_bf, atol=5e-3, rtol=5e-3)

    # Matches the full-f32 PyTorch-equivalent forward up to bf16 rounding.
    c1 = jnp.maximum(x @ wb, 0.0)
    c2 = jnp.maximum(c1 @ w1 + b1, 0.0)
    ref_f32 = c2 @ wo + bo
    assert jnp.allclose(out, ref_f32, atol=1e-1, rtol=1e-1)

    # Multi-block path: N not a multiple of the tile, small tile -> grid > 1.
    N2 = 300
    x2 = jax.random.normal(jax.random.PRNGKey(1), (N2, p), dtype=jnp.float32)
    out2 = jax.block_until_ready(net_s_forward(x2, *params, tile_n=32))
    ref2 = _ref_forward_bf16_boundary(x2, wb, w1, b1, wo, bo)
    assert out2.shape == (N2, q)
    assert jnp.allclose(out2, ref2, atol=5e-3, rtol=5e-3)

    print("KERNEL_OK")
</pallas_src>

<mosaic_0001>
module attributes {stable_mosaic.version = 11 : i64} {
  func.func @net_s_kernel(%arg0: i32, %arg1: memref<16x32xf32, #tpu.memory_space<vmem>>, %arg2: memref<32x16xbf16, #tpu.memory_space<vmem>>, %arg3: memref<16x32xbf16, #tpu.memory_space<vmem>>, %arg4: memref<1x32xf32, #tpu.memory_space<vmem>>, %arg5: memref<32x8xbf16, #tpu.memory_space<vmem>>, %arg6: memref<1x8xf32, #tpu.memory_space<vmem>>, %arg7: memref<16x8xbf16, #tpu.memory_space<vmem>>) attributes {dimension_semantics = [#tpu.dimension_semantics<parallel>], iteration_bounds = array<i64: 1>, scalar_prefetch = 0 : i64, scratch_operands = 0 : i64, tpu.core_type = #tpu.core_type<tc>, window_params = [{transform_indices = @transform_0, window_bounds = array<i64: 16, 32>}, {pipeline_mode = #tpu.pipeline_mode<synchronous>, transform_indices = @transform_1, window_bounds = array<i64: 32, 16>}, {pipeline_mode = #tpu.pipeline_mode<synchronous>, transform_indices = @transform_2, window_bounds = array<i64: 16, 32>}, {pipeline_mode = #tpu.pipeline_mode<synchronous>, transform_indices = @transform_3, window_bounds = array<i64: 1, 32>}, {pipeline_mode = #tpu.pipeline_mode<synchronous>, transform_indices = @transform_4, window_bounds = array<i64: 32, 8>}, {pipeline_mode = #tpu.pipeline_mode<synchronous>, transform_indices = @transform_5, window_bounds = array<i64: 1, 8>}, {transform_indices = @transform_6, window_bounds = array<i64: 16, 8>}]} {
    %c0 = arith.constant 0 : index
    %c0_0 = arith.constant 0 : index
    %0 = vector.load %arg1[%c0, %c0_0] : memref<16x32xf32, #tpu.memory_space<vmem>>, vector<16x32xf32>
    %1 = arith.truncf %0 : vector<16x32xf32> to vector<16x32xbf16>
    %c0_1 = arith.constant 0 : index
    %c0_2 = arith.constant 0 : index
    %2 = vector.load %arg2[%c0_1, %c0_2] : memref<32x16xbf16, #tpu.memory_space<vmem>>, vector<32x16xbf16>
    %cst = arith.constant dense<0.000000e+00> : vector<16x16xf32>
    %3 = tpu.matmul %1, %2, %cst {dimension_numbers = #tpu.dot_dimension_numbers<[1], [0], [0], [1], [0, 0, 1, 1], [], []>} : vector<16x32xbf16>, vector<32x16xbf16>, vector<16x16xf32> -> vector<16x16xf32>
    %cst_3 = arith.constant 0.000000e+00 : f32
    %4 = vector.broadcast %cst_3 : f32 to vector<16x16xf32>
    %5 = arith.maximumf %3, %4 : vector<16x16xf32>
    %6 = arith.truncf %5 : vector<16x16xf32> to vector<16x16xbf16>
    %c0_4 = arith.constant 0 : index
    %c0_5 = arith.constant 0 : index
    %7 = vector.load %arg3[%c0_4, %c0_5] : memref<16x32xbf16, #tpu.memory_space<vmem>>, vector<16x32xbf16>
    %cst_6 = arith.constant dense<0.000000e+00> : vector<16x32xf32>
    %8 = tpu.matmul %6, %7, %cst_6 {dimension_numbers = #tpu.dot_dimension_numbers<[1], [0], [0], [1], [0, 0, 1, 1], [], []>} : vector<16x16xbf16>, vector<16x32xbf16>, vector<16x32xf32> -> vector<16x32xf32>
    %c0_7 = arith.constant 0 : index
    %c0_8 = arith.constant 0 : index
    %9 = vector.load %arg4[%c0_7, %c0_8] : memref<1x32xf32, #tpu.memory_space<vmem>>, vector<1x32xf32>
    %10 = vector.broadcast %9 : vector<1x32xf32> to vector<16x32xf32>
    %11 = arith.addf %8, %10 : vector<16x32xf32>
    %cst_9 = arith.constant 0.000000e+00 : f32
    %12 = vector.broadcast %cst_9 : f32 to vector<16x32xf32>
    %13 = arith.maximumf %11, %12 : vector<16x32xf32>
    %14 = arith.truncf %13 : vector<16x32xf32> to vector<16x32xbf16>
    %c0_10 = arith.constant 0 : index
    %c0_11 = arith.constant 0 : index
    %15 = vector.load %arg5[%c0_10, %c0_11] : memref<32x8xbf16, #tpu.memory_space<vmem>>, vector<32x8xbf16>
    %cst_12 = arith.constant dense<0.000000e+00> : vector<16x8xf32>
    %16 = tpu.matmul %14, %15, %cst_12 {dimension_numbers = #tpu.dot_dimension_numbers<[1], [0], [0], [1], [0, 0, 1, 1], [], []>} : vector<16x32xbf16>, vector<32x8xbf16>, vector<16x8xf32> -> vector<16x8xf32>
    %c0_13 = arith.constant 0 : index
    %c0_14 = arith.constant 0 : index
    %17 = vector.load %arg6[%c0_13, %c0_14] : memref<1x8xf32, #tpu.memory_space<vmem>>, vector<1x8xf32>
    %18 = vector.broadcast %17 : vector<1x8xf32> to vector<16x8xf32>
    %19 = arith.addf %16, %18 : vector<16x8xf32>
    %20 = arith.truncf %19 : vector<16x8xf32> to vector<16x8xbf16>
    %c0_15 = arith.constant 0 : index
    %c0_16 = arith.constant 0 : index
    %21 = vector.load %arg7[%c0_15, %c0_16] : memref<16x8xbf16, #tpu.memory_space<vmem>>, vector<16x8xbf16>
    tpu.vector_store %arg7[%c0_15, %c0_16], %20 {strides = array<i32>} : memref<16x8xbf16, #tpu.memory_space<vmem>>, vector<16x8xbf16>,
    return
  }
  func.func @transform_0(%arg0: i32) -> (i32, i32) {
    %c0_i32 = arith.constant 0 : i32
    %c0_i32_0 = arith.constant 0 : i32
    return %arg0, %c0_i32 : i32, i32
  }
  func.func @transform_1(%arg0: i32) -> (i32, i32) {
    %c0_i32 = arith.constant 0 : i32
    %c0_i32_0 = arith.constant 0 : i32
    %c0_i32_1 = arith.constant 0 : i32
    return %c0_i32, %c0_i32_0 : i32, i32
  }
  func.func @transform_2(%arg0: i32) -> (i32, i32) {
    %c0_i32 = arith.constant 0 : i32
    %c0_i32_0 = arith.constant 0 : i32
    %c0_i32_1 = arith.constant 0 : i32
    return %c0_i32, %c0_i32_0 : i32, i32
  }
  func.func @transform_3(%arg0: i32) -> (i32, i32) {
    %c0_i32 = arith.constant 0 : i32
    %c0_i32_0 = arith.constant 0 : i32
    %c0_i32_1 = arith.constant 0 : i32
    return %c0_i32, %c0_i32_0 : i32, i32
  }
  func.func @transform_4(%arg0: i32) -> (i32, i32) {
    %c0_i32 = arith.constant 0 : i32
    %c0_i32_0 = arith.constant 0 : i32
    %c0_i32_1 = arith.constant 0 : i32
    return %c0_i32, %c0_i32_0 : i32, i32
  }
  func.func @transform_5(%arg0: i32) -> (i32, i32) {
    %c0_i32 = arith.constant 0 : i32
    %c0_i32_0 = arith.constant 0 : i32
    %c0_i32_1 = arith.constant 0 : i32
    return %c0_i32, %c0_i32_0 : i32, i32
  }
  func.func @transform_6(%arg0: i32) -> (i32, i32) {
    %c0_i32 = arith.constant 0 : i32
    %c0_i32_0 = arith.constant 0 : i32
    return %arg0, %c0_i32 : i32, i32
  }
}

</mosaic_0001>

<llo_original>
// kernel: net_s_forward.1
$region0: #{net_s_forward.1}
  #allocation0 [shape = 'u32[]', space=smem, size = 0x4, offset = 0x4, fixed_abs, tag = 'smem constant byte address 0x4 - core index']
  #allocation1 [shape = 'u32[144,128]{1,0:T(1,128)}', space=vmem, size = 0x12000, scoped, tag = 'internal scratch']
  %s0 = inlined_call_operand.vmem [shape: f32[16,32], index: 0, kind: input, shape index: {}]
  %s1 = inlined_call_operand.vmem [shape: bf16[32,16], index: 1, kind: input, shape index: {}]
  %s2 = inlined_call_operand.vmem [shape: bf16[16,32], index: 2, kind: input, shape index: {}]
  %s3 = inlined_call_operand.vmem [shape: f32[1,32], index: 3, kind: input, shape index: {}]
  %s4 = inlined_call_operand.vmem [shape: bf16[32,8], index: 4, kind: input, shape index: {}]
  %s5 = inlined_call_operand.vmem [shape: f32[1,8], index: 5, kind: input, shape index: {}]
  %s6 = inlined_call_operand.vmem [shape: bf16[16,8], index: 6, kind: output, shape index: {}]
  %s7 = sld [smem:[#allocation0]]
  $region34: #{net_s_forward.1} parent=0
    _
  %s9 = ssub.s32 1, %s7
  %s10 = scalar_select 0, %s9, %s7
  // Predicated region
  $region2: #{net_s_forward.1} parent=0 // pred_check
    _
  $region3: #{net_s_forward.1} parent=0 // pred_check_branch
    %12 = sbr.rel (0) target = $region5
  $region4: #{net_s_forward.1} parent=0 // pred_region
    _
  $region5: #{net_s_forward.1} parent=0 // pred_fallthru
    _
  // Predicated region
  $region6: #{net_s_forward.1} parent=0 // pred_check
    _
  $region7: #{net_s_forward.1} parent=0 // pred_check_branch
    %14 = sbr.rel (0) target = $region9
  $region8: #{net_s_forward.1} parent=0 // pred_region
    _
  $region9: #{net_s_forward.1} parent=0 // pred_fallthru
    _
  // Predicated region
  $region10: #{net_s_forward.1} parent=0 // pred_check
    _
  $region11: #{net_s_forward.1} parent=0 // pred_check_branch
    %16 = sbr.rel (0) target = $region13
  $region12: #{net_s_forward.1} parent=0 // pred_region
    _
  $region13: #{net_s_forward.1} parent=0 // pred_fallthru
    _
  // Predicated region
  $region14: #{net_s_forward.1} parent=0 // pred_check
    _
  $region15: #{net_s_forward.1} parent=0 // pred_check_branch
    %18 = sbr.rel (0) target = $region17
  $region16: #{net_s_forward.1} parent=0 // pred_region
    _
  $region17: #{net_s_forward.1} parent=0 // pred_fallthru
    _
  // Predicated region
  $region18: #{net_s_forward.1} parent=0 // pred_check
    _
  $region19: #{net_s_forward.1} parent=0 // pred_check_branch
    %20 = sbr.rel (0) target = $region21
  $region20: #{net_s_forward.1} parent=0 // pred_region
    _
  $region21: #{net_s_forward.1} parent=0 // pred_fallthru
    _
  // Predicated region
  $region22: #{net_s_forward.1} parent=0 // pred_check
    _
  $region23: #{net_s_forward.1} parent=0 // pred_check_branch
    %22 = sbr.rel (0) target = $region25
  $region24: #{net_s_forward.1} parent=0 // pred_region
    _
  $region25: #{net_s_forward.1} parent=0 // pred_fallthru
    _
  %v24 = vld [vmem:[%s0] sm:$0xff]
  %v25 = vld [vmem:[%s0 + $0x8] sm:$0xff]
  %v26 = vpack.c.bf16 %v25, %v24
  %v27 = vld [vmem:[%s1] sm:$0xf]
  %v28 = vld [vmem:[%s1 + $0x4] sm:$0xf]
  %v29 = vld [vmem:[%s1 + $0x8] sm:$0xf]
  %v30 = vld [vmem:[%s1 + $0xc] sm:$0xf]
  %v35 = vunpack.c.l.b16 %v27
  %v36 = vunpack.c.l.b16 %v28
  %v37 = vunpack.c.l.b16 %v29
  %v38 = vunpack.c.l.b16 %v30
  %v39 = vpack.c.b16 %v36, %v35
  %v40 = vpack.c.b16 %v38, %v37
  %vm43 = vcmask 261120
  %v45 = vsel %vm43, %v26, 0
  %47 = vmatprep.subr.bf16.mxu0 0
  %48 = vmatpush1.bf16.msra.mxu0 %v39
  %49 = vmatprep.subr.bf16.mxu0 0
  %50 = vmatpush1.bf16.msra.mxu0 %v40
  %51 = vmatprep.subr.bf16.mxu0 0
  %52 = vmatpush1.bf16.msra.mxu0 0
  %53 = vmatprep.subr.bf16.mxu0 0
  %54 = vmatpush1.bf16.msra.mxu0 0
  %55 = vmatprep.subr.bf16.mxu0 0
  %56 = vmatpush1.bf16.msra.mxu0 0
  %57 = vmatprep.subr.bf16.mxu0 0
  %58 = vmatpush1.bf16.msra.mxu0 0
  %59 = vmatprep.subr.bf16.mxu0 0
  %60 = vmatpush1.bf16.msra.mxu0 0
  %61 = vmatprep.subr.bf16.mxu0 0
  %62 = vmatpush1.bf16.msra.mxu0 0
  %63 = vmatprep.subr.bf16.mxu0 0
  %64 = vmatpush1.bf16.msra.mxu0 0
  %65 = vmatprep.subr.bf16.mxu0 0
  %66 = vmatpush1.bf16.msra.mxu0 0
  %67 = vmatprep.subr.bf16.mxu0 0
  %68 = vmatpush1.bf16.msra.mxu0 0
  %69 = vmatprep.subr.bf16.mxu0 0
  %70 = vmatpush1.bf16.msra.mxu0 0
  %71 = vmatprep.subr.bf16.mxu0 0
  %72 = vmatpush1.bf16.msra.mxu0 0
  %73 = vmatprep.subr.bf16.mxu0 0
  %74 = vmatpush1.bf16.msra.mxu0 0
  %75 = vmatprep.subr.bf16.mxu0 0
  %76 = vmatpush1.bf16.msra.mxu0 0
  %77 = vmatprep.subr.bf16.mxu0 0
  %78 = vmatpush1.bf16.msra.mxu0 0
  %79 = vmatprep.mubr.bf16.mxu0 0
  %80 = vmatmul.mubr.bf16.gmra.mrb[0].mxu0 %v45
  %v81 = vpop.f32.mrb[0].mxu0
  %v82 = vadd.f32 0.0, %v81
  %v83 = vpop.f32.mrb[0].mxu0
  %v84 = vpop.f32.mrb[0].mxu0
  %v85 = vadd.f32 0.0, %v84
  %v86 = vpop.f32.mrb[0].mxu0
  %87 = vdwg.mxu0
  %v88 = vmax.f32 %v82, 0.0
  %v89 = vmax.f32 %v85, 0.0
  %v90 = vpack.c.bf16 %v89, %v88
  %v91 = vld [vmem:[%s2] sm:$0xf]
  %v92 = vld [vmem:[%s2 + $0x4] sm:$0xf]
  %v93 = vld [vmem:[%s3] sm:$0x1]
  %v95 = vlaneseq
  %v96 = vshrl.u32 %v95, 7
  %v97 = vsub.s32 0, %v96
  %v98 = vrot.slane %v93, %v97
  %v102 = vunpack.c.l.b16 %v91
  %v103 = vunpack.c.l.b16 %v92
  %v104 = vpack.c.b16 %v103, %v102
  %vm106 = vcmask 130048
  %v108 = vsel %vm106, %v90, 0
  %110 = vmatprep.subr.bf16.mxu0 0
  %111 = vmatpush1.bf16.msra.mxu0 %v104
  %112 = vmatprep.subr.bf16.mxu0 0
  %113 = vmatpush1.bf16.msra.mxu0 0
  %114 = vmatprep.subr.bf16.mxu0 0
  %115 = vmatpush1.bf16.msra.mxu0 0
  %116 = vmatprep.subr.bf16.mxu0 0
  %117 = vmatpush1.bf16.msra.mxu0 0
  %118 = vmatprep.subr.bf16.mxu0 0
  %119 = vmatpush1.bf16.msra.mxu0 0
  %120 = vmatprep.subr.bf16.mxu0 0
  %121 = vmatpush1.bf16.msra.mxu0 0
  %122 = vmatprep.subr.bf16.mxu0 0
  %123 = vmatpush1.bf16.msra.mxu0 0
  %124 = vmatprep.subr.bf16.mxu0 0
  %125 = vmatpush1.bf16.msra.mxu0 0
  %126 = vmatprep.subr.bf16.mxu0 0
  %127 = vmatpush1.bf16.msra.mxu0 0
  %128 = vmatprep.subr.bf16.mxu0 0
  %129 = vmatpush1.bf16.msra.mxu0 0
  %130 = vmatprep.subr.bf16.mxu0 0
  %131 = vmatpush1.bf16.msra.mxu0 0
  %132 = vmatprep.subr.bf16.mxu0 0
  %133 = vmatpush1.bf16.msra.mxu0 0
  %134 = vmatprep.subr.bf16.mxu0 0
  %135 = vmatpush1.bf16.msra.mxu0 0
  %136 = vmatprep.subr.bf16.mxu0 0
  %137 = vmatpush1.bf16.msra.mxu0 0
  %138 = vmatprep.subr.bf16.mxu0 0
  %139 = vmatpush1.bf16.msra.mxu0 0
  %140 = vmatprep.subr.bf16.mxu0 0
  %141 = vmatpush1.bf16.msra.mxu0 0
  %142 = vmatprep.mubr.bf16.mxu0 0
  %143 = vmatmul.mubr.bf16.gmra.mrb[0].mxu0 %v108
  %v144 = vpop.f32.mrb[0].mxu0
  %v145 = vadd.f32 %v98, %v144
  %v146 = vpop.f32.mrb[0].mxu0
  %v147 = vpop.f32.mrb[0].mxu0
  %v148 = vadd.f32 %v98, %v147
  %v149 = vpop.f32.mrb[0].mxu0
  %150 = vdwg.mxu0
  %v151 = vmax.f32 %v145, 0.0
  %v152 = vmax.f32 %v148, 0.0
  %v153 = vpack.c.bf16 %v152, %v151
  %v154 = vld [vmem:[%s4] sm:$0xf]
  %v155 = vld [vmem:[%s4 + $0x4] sm:$0xf]
  %v156 = vld [vmem:[%s4 + $0x8] sm:$0xf]
  %v157 = vld [vmem:[%s4 + $0xc] sm:$0xf]
  %v158 = vld [vmem:[%s5] sm:$0x1]
  %v160 = vlaneseq
  %v161 = vshrl.u32 %v160, 7
  %v162 = vsub.s32 0, %v161
  %v163 = vrot.slane %v158, %v162
  %v169 = vunpack.c.l.b16 %v154
  %v170 = vunpack.c.l.b16 %v155
  %v171 = vunpack.c.l.b16 %v156
  %v172 = vunpack.c.l.b16 %v157
  %v173 = vpack.c.b16 %v170, %v169
  %v174 = vpack.c.b16 %v172, %v171
  %v178 = vsel %vm43, %v153, 0
  %180 = vmatprep.subr.bf16.mxu0 0
  %181 = vmatpush1.bf16.msra.mxu0 %v173
  %182 = vmatprep.subr.bf16.mxu0 0
  %183 = vmatpush1.bf16.msra.mxu0 %v174
  %184 = vmatprep.subr.bf16.mxu0 0
  %185 = vmatpush1.bf16.msra.mxu0 0
  %186 = vmatprep.subr.bf16.mxu0 0
  %187 = vmatpush1.bf16.msra.mxu0 0
  %188 = vmatprep.subr.bf16.mxu0 0
  %189 = vmatpush1.bf16.msra.mxu0 0
  %190 = vmatprep.subr.bf16.mxu0 0
  %191 = vmatpush1.bf16.msra.mxu0 0
  %192 = vmatprep.subr.bf16.mxu0 0
  %193 = vmatpush1.bf16.msra.mxu0 0
  %194 = vmatprep.subr.bf16.mxu0 0
  %195 = vmatpush1.bf16.msra.mxu0 0
  %196 = vmatprep.subr.bf16.mxu0 0
  %197 = vmatpush1.bf16.msra.mxu0 0
  %198 = vmatprep.subr.bf16.mxu0 0
  %199 = vmatpush1.bf16.msra.mxu0 0
  %200 = vmatprep.subr.bf16.mxu0 0
  %201 = vmatpush1.bf16.msra.mxu0 0
  %202 = vmatprep.subr.bf16.mxu0 0
  %203 = vmatpush1.bf16.msra.mxu0 0
  %204 = vmatprep.subr.bf16.mxu0 0
  %205 = vmatpush1.bf16.msra.mxu0 0
  %206 = vmatprep.subr.bf16.mxu0 0
  %207 = vmatpush1.bf16.msra.mxu0 0
  %208 = vmatprep.subr.bf16.mxu0 0
  %209 = vmatpush1.bf16.msra.mxu0 0
  %210 = vmatprep.subr.bf16.mxu0 0
  %211 = vmatpush1.bf16.msra.mxu0 0
  %212 = vmatprep.mubr.bf16.mxu0 0
  %213 = vmatmul.mubr.bf16.gmra.mrb[0].mxu0 %v178
  %v214 = vpop.f32.mrb[0].mxu0
  %v215 = vadd.f32 %v163, %v214
  %v216 = vpop.f32.mrb[0].mxu0
  %v217 = vpop.f32.mrb[0].mxu0
  %v218 = vadd.f32 %v163, %v217
  %v219 = vpop.f32.mrb[0].mxu0
  %220 = vdwg.mxu0
  %v221 = vpack.c.bf16 %v218, %v215
  %v223 = vunpack.c.l.b16 %v221
  %v224 = vunpack.c.h.b16 %v221
  %v225 = vpack.c.b16 %v223, %v223
  %v226 = vpack.c.b16 %v224, %v224
  %vm229 = vcmask 60416
  %230 = vst.msk [vmem:[%s6] sm:$0xf] %vm229, %v225
  %231 = vst.msk [vmem:[%s6 + $0x4] sm:$0xf] %vm229, %v226
  // Predicated region
  $region26: #{net_s_forward.1} parent=0 // pred_check
    _
  $region27: #{net_s_forward.1} parent=0 // pred_check_branch
    %233 = sbr.rel (0) target = $region29
  $region28: #{net_s_forward.1} parent=0 // pred_region
    _
  $region29: #{net_s_forward.1} parent=0 // pred_fallthru
    _
  // Predicated region
  $region30: #{net_s_forward.1} parent=0 // pred_check
    _
  $region31: #{net_s_forward.1} parent=0 // pred_check_branch
    %235 = sbr.rel (0) target = $region33
  $region32: #{net_s_forward.1} parent=0 // pred_region
    _
  $region33: #{net_s_forward.1} parent=0 // pred_fallthru
    _

</llo_original>
